<compile_context>
chip_gen: v7x
topology: tpu7x:2x2x1
jax: 0.10.0
libtpu: 0.0.40
codegen_flags: <defaults>
</compile_context>

<pallas_src>
import jax
import jax.numpy as jnp
from jax.experimental import pallas as pl
from jax.experimental.pallas import tpu as pltpu


_TARGET_TILE_BYTES = 2 << 20      # ~2 MiB per array per grid step
_MIN_PIPELINE_BYTES = 256 << 10   # below this a single step is fine
_VMEM_LIMIT_BYTES = 32 << 20      # 4 arrays x 2 bufs x 2 MiB = 16 MiB (+headroom)


def _complex_relu_kernel(xr_ref, xi_ref, or_ref, oi_ref):
    # Pure VPU elementwise work; weak-typed 0 avoids materializing a zero tile.
    or_ref[...] = jnp.maximum(xr_ref[...], 0)
    oi_ref[...] = jnp.maximum(xi_ref[...], 0)


def _suffix_lanes(shape):
    """Smallest trailing-dims product that is a multiple of 128, else None.

    Using a trailing-dims product keeps the collapse layout-preserving (only
    leading dims are merged beyond that point), so no relayout copy is needed
    when the last dim is already lane-aligned.
    """
    lanes = 1
    for d in reversed(shape):
        lanes *= d
        if lanes % 128 == 0:
            return lanes
    return None


def _balance_row_tile(rows, tr, sublane):
    """Prefer a sublane-aligned row tile that divides `rows` with an even step
    count: balances v7x's two TensorCores and keeps edge stores unmasked."""
    if tr >= rows:
        return tr
    best_div = None
    lo = max(sublane, ((tr // 2) // sublane) * sublane)
    cand = (tr // sublane) * sublane
    while cand >= lo:
        if rows % cand == 0:
            if (rows // cand) % 2 == 0:
                return cand
            if best_div is None:
                best_div = cand
        cand -= sublane
    return best_div if best_div is not None else tr


@jax.jit
def complex_relu_pallas(input_r, input_i):
    """ReLU applied independently to real and imaginary parts.

    Matches torch ComplexReLU.forward: (relu(input_r), relu(input_i)).
    Shapes and dtypes are preserved.
    """
    assert input_r.shape == input_i.shape
    assert input_r.dtype == input_i.dtype
    orig_shape = input_r.shape
    dtype = input_r.dtype

    total = 1
    for d in orig_shape:
        total *= d
    if total == 0:
        return input_r, input_i

    itemsize = jnp.dtype(dtype).itemsize
    # Sublane packing: 8 rows for 32-bit, 16 for bf16, 32 for 8-bit.
    sublane = max(8, 32 // itemsize)

    lanes = _suffix_lanes(orig_shape)
    if lanes is None:
        # No lane-dense (multiple-of-128) trailing layout exists.  XLA's fused
        # elementwise max already hits the HBM roofline for this op, and a
        # single whole-array block would risk masked stores / VMEM overflow.
        return jnp.maximum(input_r, 0), jnp.maximum(input_i, 0)

    rows = total // lanes
    xr2 = input_r.reshape(rows, lanes)
    xi2 = input_i.reshape(rows, lanes)

    comp_bytes = total * itemsize  # bytes per component (per input array)

    if sublane * lanes * itemsize > _TARGET_TILE_BYTES:
        # Very wide rows: tile the lane axis too (minimal row tile).
        tr = min(sublane, rows)
        tc = max(128, (_TARGET_TILE_BYTES // (tr * itemsize)) // 128 * 128)
        tc = min(tc, lanes)
    else:
        tc = lanes
        tr = _TARGET_TILE_BYTES // (lanes * itemsize)
        tr = max(sublane, (tr // sublane) * sublane)
        tr = min(tr, rows)
        # Guarantee >=2 (prefer 4) pipelined steps for mid-size inputs: a
        # single grid step serializes DMA-in -> compute -> DMA-out and leaves
        # v7x's second TensorCore idle despite the "parallel" annotation.
        if comp_bytes > _MIN_PIPELINE_BYTES and tr >= rows and rows >= 2 * sublane:
            want = 4 if rows >= 4 * sublane else 2
            tr = -(-rows // want)                                # ceil div
            tr = ((tr + sublane - 1) // sublane) * sublane       # align up
            tr = min(tr, rows)
        if tr < rows:
            tr = _balance_row_tile(rows, tr, sublane)

    row_steps = pl.cdiv(rows, tr)
    col_steps = pl.cdiv(lanes, tc)

    spec = pl.BlockSpec((tr, tc), lambda i, j: (i, j))
    cost = pl.CostEstimate(
        flops=2 * total,
        transcendentals=0,
        bytes_accessed=4 * total * itemsize,  # 2 reads + 2 writes
    )

    out_r, out_i = pl.pallas_call(
        _complex_relu_kernel,
        grid=(row_steps, col_steps),
        in_specs=[spec, spec],
        out_specs=(spec, spec),
        out_shape=(
            jax.ShapeDtypeStruct((rows, lanes), dtype),
            jax.ShapeDtypeStruct((rows, lanes), dtype),
        ),
        compiler_params=pltpu.CompilerParams(
            dimension_semantics=("parallel", "parallel"),
            vmem_limit_bytes=_VMEM_LIMIT_BYTES,
        ),
        cost_estimate=cost,
    )(xr2, xi2)

    return out_r.reshape(orig_shape), out_i.reshape(orig_shape)


def _check(shape, key):
    kr, ki = jax.random.split(key)
    x_r = jax.random.normal(kr, shape, dtype=jnp.float32)
    x_i = jax.random.normal(ki, shape, dtype=jnp.float32)
    y_r, y_i = complex_relu_pallas(x_r, x_i)
    jax.block_until_ready((y_r, y_i))
    ref_r = jnp.maximum(x_r, 0.0)
    ref_i = jnp.maximum(x_i, 0.0)
    assert y_r.shape == x_r.shape and y_i.shape == x_i.shape
    assert y_r.dtype == x_r.dtype and y_i.dtype == x_i.dtype
    assert jnp.allclose(y_r, ref_r) and jnp.allclose(y_i, ref_i)


if __name__ == "__main__":
    key = jax.random.PRNGKey(0)
    k0, k1 = jax.random.split(key)

    # Small NCHW shape consistent with the module (single-step path; lanes
    # come from the trailing 16x16=256 product).
    _check((2, 4, 16, 16), k0)

    # Modest larger shape exercising the multi-step pipelined path with a
    # layout-preserving lane dim of 128 (4 balanced grid steps).
    _check((2, 16, 128, 128), k1)

    print("KERNEL_OK")
</pallas_src>

<mosaic_0001>
module attributes {stable_mosaic.version = 11 : i64} {
  func.func @_complex_relu_kernel(%arg0: i32, %arg1: i32, %arg2: memref<8x256xf32, #tpu.memory_space<vmem>>, %arg3: memref<8x256xf32, #tpu.memory_space<vmem>>, %arg4: memref<8x256xf32, #tpu.memory_space<vmem>>, %arg5: memref<8x256xf32, #tpu.memory_space<vmem>>) attributes {dimension_semantics = [#tpu.dimension_semantics<parallel>, #tpu.dimension_semantics<parallel>], iteration_bounds = array<i64: 1, 1>, scalar_prefetch = 0 : i64, scratch_operands = 0 : i64, tpu.core_type = #tpu.core_type<tc>, window_params = [{transform_indices = @transform_0, window_bounds = array<i64: 8, 256>}, {transform_indices = @transform_1, window_bounds = array<i64: 8, 256>}, {transform_indices = @transform_2, window_bounds = array<i64: 8, 256>}, {transform_indices = @transform_3, window_bounds = array<i64: 8, 256>}]} {
    %c0 = arith.constant 0 : index
    %c0_0 = arith.constant 0 : index
    %0 = vector.load %arg2[%c0, %c0_0] : memref<8x256xf32, #tpu.memory_space<vmem>>, vector<8x256xf32>
    %cst = arith.constant 0.000000e+00 : f32
    %1 = vector.broadcast %cst : f32 to vector<8x256xf32>
    %2 = arith.maximumf %0, %1 : vector<8x256xf32>
    %c0_1 = arith.constant 0 : index
    %c0_2 = arith.constant 0 : index
    %3 = vector.load %arg4[%c0_1, %c0_2] : memref<8x256xf32, #tpu.memory_space<vmem>>, vector<8x256xf32>
    tpu.vector_store %arg4[%c0_1, %c0_2], %2 {strides = array<i32>} : memref<8x256xf32, #tpu.memory_space<vmem>>, vector<8x256xf32>,
    %c0_3 = arith.constant 0 : index
    %c0_4 = arith.constant 0 : index
    %4 = vector.load %arg3[%c0_3, %c0_4] : memref<8x256xf32, #tpu.memory_space<vmem>>, vector<8x256xf32>
    %cst_5 = arith.constant 0.000000e+00 : f32
    %5 = vector.broadcast %cst_5 : f32 to vector<8x256xf32>
    %6 = arith.maximumf %4, %5 : vector<8x256xf32>
    %c0_6 = arith.constant 0 : index
    %c0_7 = arith.constant 0 : index
    %7 = vector.load %arg5[%c0_6, %c0_7] : memref<8x256xf32, #tpu.memory_space<vmem>>, vector<8x256xf32>
    tpu.vector_store %arg5[%c0_6, %c0_7], %6 {strides = array<i32>} : memref<8x256xf32, #tpu.memory_space<vmem>>, vector<8x256xf32>,
    return
  }
  func.func @transform_0(%arg0: i32, %arg1: i32) -> (i32, i32) {
    %c0_i32 = arith.constant 0 : i32
    return %arg0, %arg1 : i32, i32
  }
  func.func @transform_1(%arg0: i32, %arg1: i32) -> (i32, i32) {
    %c0_i32 = arith.constant 0 : i32
    return %arg0, %arg1 : i32, i32
  }
  func.func @transform_2(%arg0: i32, %arg1: i32) -> (i32, i32) {
    %c0_i32 = arith.constant 0 : i32
    return %arg0, %arg1 : i32, i32
  }
  func.func @transform_3(%arg0: i32, %arg1: i32) -> (i32, i32) {
    %c0_i32 = arith.constant 0 : i32
    return %arg0, %arg1 : i32, i32
  }
}

</mosaic_0001>

<llo_original>
// kernel: complex_relu_pallas.1
$region0: #{complex_relu_pallas.1}
  #allocation0 [shape = 'u32[]', space=smem, size = 0x4, offset = 0x4, fixed_abs, tag = 'smem constant byte address 0x4 - core index']
  #allocation1 [shape = 'u32[144,128]{1,0:T(1,128)}', space=vmem, size = 0x12000, scoped, tag = 'internal scratch']
  %s0 = inlined_call_operand.vmem [shape: f32[8,256], index: 0, kind: input, shape index: {}]
  %s1 = inlined_call_operand.vmem [shape: f32[8,256], index: 1, kind: input, shape index: {}]
  %s2 = inlined_call_operand.vmem [shape: f32[8,256], index: 2, kind: output, shape index: {0}]
  %s3 = inlined_call_operand.vmem [shape: f32[8,256], index: 3, kind: output, shape index: {1}]
  %4 = xla_tuple %s2, %s3
  %s5 = sld [smem:[#allocation0]]
  $region26: #{complex_relu_pallas.1} parent=0
    _
  %s7 = ssub.s32 1, %s5
  %s8 = scalar_select 0, %s7, %s5
  // Predicated region
  $region2: #{complex_relu_pallas.1} parent=0 // pred_check
    _
  $region3: #{complex_relu_pallas.1} parent=0 // pred_check_branch
    %10 = sbr.rel (0) target = $region5
  $region4: #{complex_relu_pallas.1} parent=0 // pred_region
    _
  $region5: #{complex_relu_pallas.1} parent=0 // pred_fallthru
    _
  // Predicated region
  $region6: #{complex_relu_pallas.1} parent=0 // pred_check
    _
  $region7: #{complex_relu_pallas.1} parent=0 // pred_check_branch
    %12 = sbr.rel (0) target = $region9
  $region8: #{complex_relu_pallas.1} parent=0 // pred_region
    _
  $region9: #{complex_relu_pallas.1} parent=0 // pred_fallthru
    _
  %v13 = vld [vmem:[%s0] sm:$0xff]
  %v14 = vld [vmem:[%s0 + $0x8] sm:$0xff]
  %v15 = vmax.f32 %v13, 0.0
  %v16 = vmax.f32 %v14, 0.0
  %17 = vst [vmem:[%s2] sm:$0xff] %v15
  %18 = vst [vmem:[%s2 + $0x8] sm:$0xff] %v16
  %v19 = vld [vmem:[%s1] sm:$0xff]
  %v20 = vld [vmem:[%s1 + $0x8] sm:$0xff]
  %v21 = vmax.f32 %v19, 0.0
  %v22 = vmax.f32 %v20, 0.0
  %23 = vst [vmem:[%s3] sm:$0xff] %v21
  %24 = vst [vmem:[%s3 + $0x8] sm:$0xff] %v22
  // Predicated region
  $region10: #{complex_relu_pallas.1} parent=0 // pred_check
    _
  $region11: #{complex_relu_pallas.1} parent=0 // pred_check_branch
    %26 = sbr.rel (0) target = $region13
  $region12: #{complex_relu_pallas.1} parent=0 // pred_region
    _
  $region13: #{complex_relu_pallas.1} parent=0 // pred_fallthru
    _
  // Predicated region
  $region14: #{complex_relu_pallas.1} parent=0 // pred_check
    _
  $region15: #{complex_relu_pallas.1} parent=0 // pred_check_branch
    %28 = sbr.rel (0) target = $region17
  $region16: #{complex_relu_pallas.1} parent=0 // pred_region
    _
  $region17: #{complex_relu_pallas.1} parent=0 // pred_fallthru
    _
  // Predicated region
  $region18: #{complex_relu_pallas.1} parent=0 // pred_check
    _
  $region19: #{complex_relu_pallas.1} parent=0 // pred_check_branch
    %30 = sbr.rel (0) target = $region21
  $region20: #{complex_relu_pallas.1} parent=0 // pred_region
    _
  $region21: #{complex_relu_pallas.1} parent=0 // pred_fallthru
    _
  // Predicated region
  $region22: #{complex_relu_pallas.1} parent=0 // pred_check
    _
  $region23: #{complex_relu_pallas.1} parent=0 // pred_check_branch
    %32 = sbr.rel (0) target = $region25
  $region24: #{complex_relu_pallas.1} parent=0 // pred_region
    _
  $region25: #{complex_relu_pallas.1} parent=0 // pred_fallthru
    _

</llo_original>
